<compile_context>
chip_gen: v6e
topology: v6e:2x2x1
jax: 0.10.0
libtpu: 0.0.40
codegen_flags: <defaults>
</compile_context>

<pallas_src>
import jax
import jax.numpy as jnp
import numpy as np
from jax.experimental import pallas as pl
from jax.experimental.pallas import tpu as pltpu

IN_FEATURES = 225
HIDDEN = 50
N_CLASSES = 2

# Max batch-tile rows per grid step (multiple of 8; ~1.8 MB of f32 x-tile).
_TB_MAX = 2048


def mlp_kernel(x_ref, w1_ref, b1_ref, w2_ref, b2_ref, out_ref):
    # x_ref  : (tb, IN_FEATURES)       natural row-major batch tile
    # w1_ref : (IN_FEATURES, HIDDEN)   pre-transposed Linear-1 weight
    # b1_ref : (1, HIDDEN)
    # w2_ref : (HIDDEN, N_CLASSES)     pre-transposed Linear-2 weight
    # b2_ref : (1, N_CLASSES)
    # out_ref: (tb, N_CLASSES)
    h = jnp.dot(x_ref[...], w1_ref[...], preferred_element_type=jnp.float32)
    h = jnp.maximum(h + b1_ref[...], 0.0)   # ReLU; Dropout(0.5) is identity in eval()
    out_ref[...] = (
        jnp.dot(h, w2_ref[...], preferred_element_type=jnp.float32) + b2_ref[...]
    )


def make_params(key):
    """Deterministic synthetic parameters with the PyTorch module's shapes."""
    ks = jax.random.split(key, 4)
    w1 = 0.08 * jax.random.normal(ks[0], (HIDDEN, IN_FEATURES), jnp.float32)
    b1 = 0.10 * jax.random.normal(ks[1], (HIDDEN,), jnp.float32)
    w2 = 0.10 * jax.random.normal(ks[2], (N_CLASSES, HIDDEN), jnp.float32)
    b2 = 0.10 * jax.random.normal(ks[3], (N_CLASSES,), jnp.float32)
    return w1, b1, w2, b2


@jax.jit
def mlp_forward(x, params):
    """x: (B, 225) f32 -> (B, 2) f32, matching _ClassificationNetMLP in eval mode."""
    w1, b1, w2, b2 = params
    B = x.shape[0]

    # Batch tile: as large as _TB_MAX, but no larger than the batch rounded up
    # to the 8-row sublane granule (avoids pointless compute for tiny batches).
    tb = min(_TB_MAX, max(8, pl.cdiv(B, 8) * 8))
    grid = (pl.cdiv(B, tb),)        # boundary block masks any partial last tile

    # One-time layout plumbing on the tiny parameters only (x is untouched).
    w1t = w1.T                       # (IN_FEATURES, HIDDEN)
    w2t = w2.T                       # (HIDDEN, N_CLASSES)
    b1r = b1.reshape(1, HIDDEN)
    b2r = b2.reshape(1, N_CLASSES)

    return pl.pallas_call(
        mlp_kernel,
        out_shape=jax.ShapeDtypeStruct((B, N_CLASSES), jnp.float32),
        grid=grid,
        in_specs=[
            pl.BlockSpec((tb, IN_FEATURES), lambda i: (i, 0)),        # x tile
            pl.BlockSpec((IN_FEATURES, HIDDEN), lambda i: (0, 0)),    # W1^T (resident)
            pl.BlockSpec((1, HIDDEN), lambda i: (0, 0)),              # b1
            pl.BlockSpec((HIDDEN, N_CLASSES), lambda i: (0, 0)),      # W2^T
            pl.BlockSpec((1, N_CLASSES), lambda i: (0, 0)),           # b2
        ],
        out_specs=pl.BlockSpec((tb, N_CLASSES), lambda i: (i, 0)),
        compiler_params=pltpu.CompilerParams(
            dimension_semantics=("parallel",)),
    )(x, w1t, b1r, w2t, b2r)


def reference_forward(x, params):
    """Pure-JAX reference with PyTorch semantics (eval mode: dropout = identity)."""
    w1, b1, w2, b2 = params
    hi = jax.lax.Precision.HIGHEST
    h = jnp.maximum(jnp.dot(x, w1.T, precision=hi) + b1[None, :], 0.0)
    return jnp.dot(h, w2.T, precision=hi) + b2[None, :]


if __name__ == "__main__":
    key = jax.random.PRNGKey(0)
    pkey, xkey1, xkey2 = jax.random.split(key, 3)
    params = make_params(pkey)

    # Small batch (module-sized input: batch=2, features=225).
    B = 2
    x = jax.random.normal(xkey1, (B, IN_FEATURES), jnp.float32)
    out = jax.block_until_ready(mlp_forward(x, params))
    ref = reference_forward(x, params)
    np.testing.assert_allclose(np.asarray(out), np.asarray(ref), rtol=1e-3, atol=1e-3)
    assert out.shape == (B, N_CLASSES)

    # Non-multiple-of-8 batch to exercise the masked boundary block.
    B2 = 37
    x2 = jax.random.normal(xkey2, (B2, IN_FEATURES), jnp.float32)
    out2 = jax.block_until_ready(mlp_forward(x2, params))
    ref2 = reference_forward(x2, params)
    np.testing.assert_allclose(np.asarray(out2), np.asarray(ref2), rtol=1e-3, atol=1e-3)
    assert out2.shape == (B2, N_CLASSES)

    print("KERNEL_OK")
</pallas_src>

<mosaic_0001>
module attributes {stable_mosaic.version = 11 : i64} {
  func.func @mlp_kernel(%arg0: i32, %arg1: memref<8x225xf32, #tpu.memory_space<vmem>>, %arg2: memref<225x50xf32, #tpu.memory_space<vmem>>, %arg3: memref<1x50xf32, #tpu.memory_space<vmem>>, %arg4: memref<50x2xf32, #tpu.memory_space<vmem>>, %arg5: memref<1x2xf32, #tpu.memory_space<vmem>>, %arg6: memref<8x2xf32, #tpu.memory_space<vmem>>) attributes {dimension_semantics = [#tpu.dimension_semantics<parallel>], iteration_bounds = array<i64: 1>, scalar_prefetch = 0 : i64, scratch_operands = 0 : i64, tpu.core_type = #tpu.core_type<tc>, window_params = [{transform_indices = @transform_0, window_bounds = array<i64: 8, 225>}, {pipeline_mode = #tpu.pipeline_mode<synchronous>, transform_indices = @transform_1, window_bounds = array<i64: 225, 50>}, {pipeline_mode = #tpu.pipeline_mode<synchronous>, transform_indices = @transform_2, window_bounds = array<i64: 1, 50>}, {pipeline_mode = #tpu.pipeline_mode<synchronous>, transform_indices = @transform_3, window_bounds = array<i64: 50, 2>}, {pipeline_mode = #tpu.pipeline_mode<synchronous>, transform_indices = @transform_4, window_bounds = array<i64: 1, 2>}, {transform_indices = @transform_5, window_bounds = array<i64: 8, 2>}]} {
    %c0 = arith.constant 0 : index
    %c0_0 = arith.constant 0 : index
    %0 = vector.load %arg1[%c0, %c0_0] : memref<8x225xf32, #tpu.memory_space<vmem>>, vector<8x225xf32>
    %c0_1 = arith.constant 0 : index
    %c0_2 = arith.constant 0 : index
    %1 = vector.load %arg2[%c0_1, %c0_2] : memref<225x50xf32, #tpu.memory_space<vmem>>, vector<225x50xf32>
    %cst = arith.constant dense<0.000000e+00> : vector<8x50xf32>
    %2 = tpu.matmul %0, %1, %cst {dimension_numbers = #tpu.dot_dimension_numbers<[1], [0], [0], [1], [0, 0, 1, 1], [], []>} : vector<8x225xf32>, vector<225x50xf32>, vector<8x50xf32> -> vector<8x50xf32>
    %c0_3 = arith.constant 0 : index
    %c0_4 = arith.constant 0 : index
    %3 = vector.load %arg3[%c0_3, %c0_4] : memref<1x50xf32, #tpu.memory_space<vmem>>, vector<1x50xf32>
    %4 = vector.broadcast %3 : vector<1x50xf32> to vector<8x50xf32>
    %5 = arith.addf %2, %4 : vector<8x50xf32>
    %cst_5 = arith.constant 0.000000e+00 : f32
    %6 = vector.broadcast %cst_5 : f32 to vector<8x50xf32>
    %7 = arith.maximumf %5, %6 : vector<8x50xf32>
    %c0_6 = arith.constant 0 : index
    %c0_7 = arith.constant 0 : index
    %8 = vector.load %arg4[%c0_6, %c0_7] : memref<50x2xf32, #tpu.memory_space<vmem>>, vector<50x2xf32>
    %cst_8 = arith.constant dense<0.000000e+00> : vector<8x2xf32>
    %9 = tpu.matmul %7, %8, %cst_8 {dimension_numbers = #tpu.dot_dimension_numbers<[1], [0], [0], [1], [0, 0, 1, 1], [], []>} : vector<8x50xf32>, vector<50x2xf32>, vector<8x2xf32> -> vector<8x2xf32>
    %c0_9 = arith.constant 0 : index
    %c0_10 = arith.constant 0 : index
    %10 = vector.load %arg5[%c0_9, %c0_10] : memref<1x2xf32, #tpu.memory_space<vmem>>, vector<1x2xf32>
    %11 = vector.broadcast %10 : vector<1x2xf32> to vector<8x2xf32>
    %12 = arith.addf %9, %11 : vector<8x2xf32>
    %c0_11 = arith.constant 0 : index
    %c0_12 = arith.constant 0 : index
    %13 = vector.load %arg6[%c0_11, %c0_12] : memref<8x2xf32, #tpu.memory_space<vmem>>, vector<8x2xf32>
    tpu.vector_store %arg6[%c0_11, %c0_12], %12 {strides = array<i32>} : memref<8x2xf32, #tpu.memory_space<vmem>>, vector<8x2xf32>,
    return
  }
  func.func @transform_0(%arg0: i32) -> (i32, i32) {
    %c0_i32 = arith.constant 0 : i32
    %c0_i32_0 = arith.constant 0 : i32
    return %arg0, %c0_i32 : i32, i32
  }
  func.func @transform_1(%arg0: i32) -> (i32, i32) {
    %c0_i32 = arith.constant 0 : i32
    %c0_i32_0 = arith.constant 0 : i32
    %c0_i32_1 = arith.constant 0 : i32
    return %c0_i32, %c0_i32_0 : i32, i32
  }
  func.func @transform_2(%arg0: i32) -> (i32, i32) {
    %c0_i32 = arith.constant 0 : i32
    %c0_i32_0 = arith.constant 0 : i32
    %c0_i32_1 = arith.constant 0 : i32
    return %c0_i32, %c0_i32_0 : i32, i32
  }
  func.func @transform_3(%arg0: i32) -> (i32, i32) {
    %c0_i32 = arith.constant 0 : i32
    %c0_i32_0 = arith.constant 0 : i32
    %c0_i32_1 = arith.constant 0 : i32
    return %c0_i32, %c0_i32_0 : i32, i32
  }
  func.func @transform_4(%arg0: i32) -> (i32, i32) {
    %c0_i32 = arith.constant 0 : i32
    %c0_i32_0 = arith.constant 0 : i32
    %c0_i32_1 = arith.constant 0 : i32
    return %c0_i32, %c0_i32_0 : i32, i32
  }
  func.func @transform_5(%arg0: i32) -> (i32, i32) {
    %c0_i32 = arith.constant 0 : i32
    %c0_i32_0 = arith.constant 0 : i32
    return %arg0, %c0_i32 : i32, i32
  }
}

</mosaic_0001>

<llo_original>
// kernel: mlp_forward.1
$region0: #{mlp_forward.1}
  #allocation0 [shape = 'u32[]', space=smem, size = 0x4, offset = 0x4, fixed_abs, tag = 'smem constant byte address 0x4 - core index']
  #allocation1 [shape = 'u32[144,128]{1,0:T(1,128)}', space=vmem, size = 0x12000, scoped, tag = 'internal scratch']
  %s0 = inlined_call_operand.vmem [shape: f32[2,225], index: 0, kind: input, shape index: {}]
  %s1 = inlined_call_operand.vmem [shape: f32[225,50], index: 1, kind: input, shape index: {}]
  %s2 = inlined_call_operand.vmem [shape: f32[1,50], index: 2, kind: input, shape index: {}]
  %s3 = inlined_call_operand.vmem [shape: f32[50,2], index: 3, kind: input, shape index: {}]
  %s4 = inlined_call_operand.vmem [shape: f32[1,2], index: 4, kind: input, shape index: {}]
  %s5 = inlined_call_operand.hbm [shape: f32[2,2], index: 5, kind: output, shape index: {}]
  %s6 = sld [smem:[#allocation0]]
  $region30: #{mlp_forward.1} parent=0
    _
  %s8 = ssub.s32 1, %s6
  %s9 = scalar_select 0, %s8, %s6
  $region1: #{mlp_forward.1} parent=0
    #allocation2 [shape = 'u8[4096]{0}', space=vmem, size = 0x1000, scoped, tag = 'output window, operand 0, single buffered']
    #allocation3 [shape = 's32[1]{0}', space=sflag, size = 0x4, scoped, tag = 'scoped memory for mlp_forward.1']
    %10 = vsyncpa [#allocation3], 0
    // Predicated region
    $region2: #{mlp_forward.1} parent=1 // pred_check
      _
    $region3: #{mlp_forward.1} parent=1 // pred_check_branch
      %12 = sbr.rel (0) target = $region5
    $region4: #{mlp_forward.1} parent=1 // pred_region
      _
    $region5: #{mlp_forward.1} parent=1 // pred_fallthru
      _
    // Predicated region
    $region6: #{mlp_forward.1} parent=1 // pred_check
      _
    $region7: #{mlp_forward.1} parent=1 // pred_check_branch
      %14 = sbr.rel (0) target = $region9
    $region8: #{mlp_forward.1} parent=1 // pred_region
      _
    $region9: #{mlp_forward.1} parent=1 // pred_fallthru
      _
    // Predicated region
    $region10: #{mlp_forward.1} parent=1 // pred_check
      _
    $region11: #{mlp_forward.1} parent=1 // pred_check_branch
      %16 = sbr.rel (0) target = $region13
    $region12: #{mlp_forward.1} parent=1 // pred_region
      _
    $region13: #{mlp_forward.1} parent=1 // pred_fallthru
      _
    // Predicated region
    $region14: #{mlp_forward.1} parent=1 // pred_check
      _
    $region15: #{mlp_forward.1} parent=1 // pred_check_branch
      %18 = sbr.rel (0) target = $region17
    $region16: #{mlp_forward.1} parent=1 // pred_region
      _
    $region17: #{mlp_forward.1} parent=1 // pred_fallthru
      _
    // Predicated region
    $region18: #{mlp_forward.1} parent=1 // pred_check
      _
    $region19: #{mlp_forward.1} parent=1 // pred_check_branch
      %20 = sbr.rel (0) target = $region21
    $region20: #{mlp_forward.1} parent=1 // pred_region
      _
    $region21: #{mlp_forward.1} parent=1 // pred_fallthru
      _
    %v21 = vld [vmem:[%s0] sm:$0xf]
    %v22 = vld [vmem:[%s0 + $0x4] sm:$0xf]
    %v23 = vld [vmem:[%s0 + $0x8] sm:$0xf]
    %v24 = vld [vmem:[%s0 + $0xc] sm:$0xf]
    %v25 = vld [vmem:[%s1] sm:$0xff]
    %v26 = vld [vmem:[%s1 + $0x8] sm:$0xff]
    %v27 = vld [vmem:[%s1 + $0x10] sm:$0xff]
    %v28 = vld [vmem:[%s1 + $0x18] sm:$0xff]
    %v29 = vld [vmem:[%s1 + $0x20] sm:$0xff]
    %v30 = vld [vmem:[%s1 + $0x28] sm:$0xff]
    %v31 = vld [vmem:[%s1 + $0x30] sm:$0xff]
    %v32 = vld [vmem:[%s1 + $0x38] sm:$0xff]
    %v33 = vld [vmem:[%s1 + $0x40] sm:$0xff]
    %v34 = vld [vmem:[%s1 + $0x48] sm:$0xff]
    %v35 = vld [vmem:[%s1 + $0x50] sm:$0xff]
    %v36 = vld [vmem:[%s1 + $0x58] sm:$0xff]
    %v37 = vld [vmem:[%s1 + $0x60] sm:$0xff]
    %v38 = vld [vmem:[%s1 + $0x68] sm:$0xff]
    %v39 = vld [vmem:[%s1 + $0x70] sm:$0xff]
    %v40 = vld [vmem:[%s1 + $0x78] sm:$0xff]
    %v41 = vld [vmem:[%s1 + $0x80] sm:$0xff]
    %v42 = vld [vmem:[%s1 + $0x88] sm:$0xff]
    %v43 = vld [vmem:[%s1 + $0x90] sm:$0xff]
    %v44 = vld [vmem:[%s1 + $0x98] sm:$0xff]
    %v45 = vld [vmem:[%s1 + $0xa0] sm:$0xff]
    %v46 = vld [vmem:[%s1 + $0xa8] sm:$0xff]
    %v47 = vld [vmem:[%s1 + $0xb0] sm:$0xff]
    %v48 = vld [vmem:[%s1 + $0xb8] sm:$0xff]
    %v49 = vld [vmem:[%s1 + $0xc0] sm:$0xff]
    %v50 = vld [vmem:[%s1 + $0xc8] sm:$0xff]
    %v51 = vld [vmem:[%s1 + $0xd0] sm:$0xff]
    %v52 = vld [vmem:[%s1 + $0xd8] sm:$0xff]
    %v53 = vld [vmem:[%s1 + $0xe0] sm:$0x1]
    %v54 = vld [vmem:[%s2] sm:$0x1]
    %v56 = vlaneseq
    %v57 = vshrl.u32 %v56, 7
    %v58 = vsub.s32 0, %v57
    %v59 = vrot.slane %v54, %v58
    %v65 = vcombine.low %v21, %v22
    %v66 = vcombine.low %v23, %v24
    %v68 = vunpack.c.l.s4 1983009808
    %v69 = vunpack.c.0.s8 %v68
    %v70 = vlaneseq
    %v71 = vshrl.u32 %v70, 7
    %v72 = vsub.s32 %v69, %v71
    %v73 = vrot.slane %v65, %v72
    %v75 = vunpack.c.l.s4 1983009808
    %v76 = vunpack.c.0.s8 %v75
    %v77 = vlaneseq
    %v78 = vshrl.u32 %v77, 7
    %v79 = vsub.s32 %v76, %v78
    %v80 = vrot.slane %v66, %v79
    %v81 = vcombine.low %v73, %v80
    %v82 = vcombine.high %v73, %v80
    %vm84 = vcmask 793600
    %v85 = vsel %vm84, %v82, 0
    %vm87 = vcmask 1040384
    %v89 = vsel %vm87, %v53, 0
    %91 = vmatprep.subr.mxu0 0.0
    %92 = vmatpush1.msra.mxu0 %v40
    %93 = vmatprep.subr.mxu0 0.0
    %94 = vmatpush1.msra.mxu0 %v39
    %95 = vmatprep.subr.mxu0 0.0
    %96 = vmatpush1.msra.mxu0 %v38
    %97 = vmatprep.subr.mxu0 0.0
    %98 = vmatpush1.msra.mxu0 %v37
    %99 = vmatprep.subr.mxu0 0.0
    %100 = vmatpush1.msra.mxu0 %v36
    %101 = vmatprep.subr.mxu0 0.0
    %102 = vmatpush1.msra.mxu0 %v35
    %103 = vmatprep.subr.mxu0 0.0
    %104 = vmatpush1.msra.mxu0 %v34
    %105 = vmatprep.subr.mxu0 0.0
    %106 = vmatpush1.msra.mxu0 %v33
    %107 = vmatprep.subr.mxu0 0.0
    %108 = vmatpush1.msra.mxu0 %v32
    %109 = vmatprep.subr.mxu0 0.0
    %110 = vmatpush1.msra.mxu0 %v31
    %111 = vmatprep.subr.mxu0 0.0
    %112 = vmatpush1.msra.mxu0 %v30
    %113 = vmatprep.subr.mxu0 0.0
    %114 = vmatpush1.msra.mxu0 %v29
    %115 = vmatprep.subr.mxu0 0.0
    %116 = vmatpush1.msra.mxu0 %v28
    %117 = vmatprep.subr.mxu0 0.0
    %118 = vmatpush1.msra.mxu0 %v27
    %119 = vmatprep.subr.mxu0 0.0
    %120 = vmatpush1.msra.mxu0 %v26
    %121 = vmatprep.subr.mxu0 0.0
    %122 = vmatpush1.msra.mxu0 %v25
    %123 = vmatprep.subr.mxu0 0.0
    %124 = vmatpush2.msra.mxu0 0.0
    %125 = vmatprep.subr.mxu0 0.0
    %126 = vmatpush2.msra.mxu0 0.0
    %127 = vmatprep.subr.mxu0 0.0
    %128 = vmatpush2.msra.mxu0 0.0
    %129 = vmatprep.subr.mxu0 0.0
    %130 = vmatpush2.msra.mxu0 %v89
    %131 = vmatprep.subr.mxu0 0.0
    %132 = vmatpush2.msra.mxu0 %v52
    %133 = vmatprep.subr.mxu0 0.0
    %134 = vmatpush2.msra.mxu0 %v51
    %135 = vmatprep.subr.mxu0 0.0
    %136 = vmatpush2.msra.mxu0 %v50
    %137 = vmatprep.subr.mxu0 0.0
    %138 = vmatpush2.msra.mxu0 %v49
    %139 = vmatprep.subr.mxu0 0.0
    %140 = vmatpush2.msra.mxu0 %v48
    %141 = vmatprep.subr.mxu0 0.0
    %142 = vmatpush2.msra.mxu0 %v47
    %143 = vmatprep.subr.mxu0 0.0
    %144 = vmatpush2.msra.mxu0 %v46
    %145 = vmatprep.subr.mxu0 0.0
    %146 = vmatpush2.msra.mxu0 %v45
    %147 = vmatprep.subr.mxu0 0.0
    %148 = vmatpush2.msra.mxu0 %v44
    %149 = vmatprep.subr.mxu0 0.0
    %150 = vmatpush2.msra.mxu0 %v43
    %151 = vmatprep.subr.mxu0 0.0
    %152 = vmatpush2.msra.mxu0 %v42
    %153 = vmatprep.subr.mxu0 0.0
    %154 = vmatpush2.msra.mxu0 %v41
    %155 = vmatprep.mubr.f32.mxu0 %v85
    %156 = vmatmul.mubr.f32.gmra.mxu0 %v81
    %v157 = vpop.f32.mrf.mxu0
    %v158 = vadd.f32 %v59, %v157
    %v159 = vpop.f32.mrf.mxu0
    %160 = vdwg.mxu0
    %v161 = vmax.f32 %v158, 0.0
    %v162 = vld [vmem:[%s3] sm:$0xff]
    %v163 = vld [vmem:[%s3 + $0x8] sm:$0xff]
    %v164 = vld [vmem:[%s3 + $0x10] sm:$0xff]
    %v165 = vld [vmem:[%s3 + $0x18] sm:$0xff]
    %v166 = vld [vmem:[%s3 + $0x20] sm:$0xff]
    %v167 = vld [vmem:[%s3 + $0x28] sm:$0xff]
    %v168 = vld [vmem:[%s3 + $0x30] sm:$0x3]
    %v169 = vld [vmem:[%s4] sm:$0x1]
    %v171 = vlaneseq
    %v172 = vshrl.u32 %v171, 7
    %v173 = vsub.s32 0, %v172
    %v174 = vrot.slane %v169, %v173
    %vm176 = vcmask 408576
    %v178 = vsel %vm176, %v161, 0
    %vm180 = vcmask 1041408
    %v182 = vsel %vm180, %v168, 0
    %184 = vmatprep.subr.mxu0 0.0
    %185 = vmatpush1.msra.mxu0 0.0
    %186 = vmatprep.subr.mxu0 0.0
    %187 = vmatpush1.msra.mxu0 0.0
    %188 = vmatprep.subr.mxu0 0.0
    %189 = vmatpush1.msra.mxu0 0.0
    %190 = vmatprep.subr.mxu0 0.0
    %191 = vmatpush1.msra.mxu0 0.0
    %192 = vmatprep.subr.mxu0 0.0
    %193 = vmatpush1.msra.mxu0 0.0
    %194 = vmatprep.subr.mxu0 0.0
    %195 = vmatpush1.msra.mxu0 0.0
    %196 = vmatprep.subr.mxu0 0.0
    %197 = vmatpush1.msra.mxu0 0.0
    %198 = vmatprep.subr.mxu0 0.0
    %199 = vmatpush1.msra.mxu0 0.0
    %200 = vmatprep.subr.mxu0 0.0
    %201 = vmatpush1.msra.mxu0 0.0
    %202 = vmatprep.subr.mxu0 0.0
    %203 = vmatpush1.msra.mxu0 %v182
    %204 = vmatprep.subr.mxu0 0.0
    %205 = vmatpush1.msra.mxu0 %v167
    %206 = vmatprep.subr.mxu0 0.0
    %207 = vmatpush1.msra.mxu0 %v166
    %208 = vmatprep.subr.mxu0 0.0
    %209 = vmatpush1.msra.mxu0 %v165
    %210 = vmatprep.subr.mxu0 0.0
    %211 = vmatpush1.msra.mxu0 %v164
    %212 = vmatprep.subr.mxu0 0.0
    %213 = vmatpush1.msra.mxu0 %v163
    %214 = vmatprep.subr.mxu0 0.0
    %215 = vmatpush1.msra.mxu0 %v162
    %216 = vmatprep.subr.mxu0 0.0
    %217 = vmatpush2.msra.mxu0 0.0
    %218 = vmatprep.subr.mxu0 0.0
    %219 = vmatpush2.msra.mxu0 0.0
    %220 = vmatprep.subr.mxu0 0.0
    %221 = vmatpush2.msra.mxu0 0.0
    %222 = vmatprep.subr.mxu0 0.0
    %223 = vmatpush2.msra.mxu0 0.0
    %224 = vmatprep.subr.mxu0 0.0
    %225 = vmatpush2.msra.mxu0 0.0
    %226 = vmatprep.subr.mxu0 0.0
    %227 = vmatpush2.msra.mxu0 0.0
    %228 = vmatprep.subr.mxu0 0.0
    %229 = vmatpush2.msra.mxu0 0.0
    %230 = vmatprep.subr.mxu0 0.0
    %231 = vmatpush2.msra.mxu0 0.0
    %232 = vmatprep.subr.mxu0 0.0
    %233 = vmatpush2.msra.mxu0 0.0
    %234 = vmatprep.subr.mxu0 0.0
    %235 = vmatpush2.msra.mxu0 0.0
    %236 = vmatprep.subr.mxu0 0.0
    %237 = vmatpush2.msra.mxu0 0.0
    %238 = vmatprep.subr.mxu0 0.0
    %239 = vmatpush2.msra.mxu0 0.0
    %240 = vmatprep.subr.mxu0 0.0
    %241 = vmatpush2.msra.mxu0 0.0
    %242 = vmatprep.subr.mxu0 0.0
    %243 = vmatpush2.msra.mxu0 0.0
    %244 = vmatprep.subr.mxu0 0.0
    %245 = vmatpush2.msra.mxu0 0.0
    %246 = vmatprep.subr.mxu0 0.0
    %247 = vmatpush2.msra.mxu0 0.0
    %248 = vmatprep.mubr.f32.mxu0 0.0
    %249 = vmatmul.mubr.f32.gmra.mxu0 %v178
    %v250 = vpop.f32.mrf.mxu0
    %v251 = vadd.f32 %v174, %v250
    %v252 = vpop.f32.mrf.mxu0
    %253 = vdwg.mxu0
    %vm254 = vcmask 15360
    %255 = vst.msk [vmem:[#allocation2] sm:$0xff] %vm254, %v251
    // Predicated region
    $region22: #{mlp_forward.1} parent=1 // pred_check
      _
    $region23: #{mlp_forward.1} parent=1 // pred_check_branch
      %257 = sbr.rel (0) target = $region25
    $region24: #{mlp_forward.1} parent=1 // pred_region
      %s259 = ssub.s32 128, 32
      %260 = vsyncadd [#allocation3], %s259
      %s261 = sshll.u32 [#allocation2], 4
      %s262 = int_to_ptr.vmem [resolvable:$true] %s261
      %267 = dma.vmem_to_hbm [thread:$0]  %s262, 32, %s5, [#allocation3], 32, 32, 2
    $region25: #{mlp_forward.1} parent=1 // pred_fallthru
      _
    // Predicated region
    $region26: #{mlp_forward.1} parent=1 // pred_check
      _
    $region27: #{mlp_forward.1} parent=1 // pred_check_branch
      %269 = sbr.rel (0) target = $region29
    $region28: #{mlp_forward.1} parent=1 // pred_region
      %270 = dma.done [#allocation3], 128
    $region29: #{mlp_forward.1} parent=1 // pred_fallthru
      _
    %271 = vsyncpa [#allocation3], 1

</llo_original>
